<compile_context>
chip_gen: v7x
topology: tpu7x:2x2x1
jax: 0.10.0
libtpu: 0.0.40
codegen_flags: <defaults>
</compile_context>

<pallas_src>
import functools

import jax
import jax.numpy as jnp
from jax.experimental import pallas as pl
from jax.experimental.pallas import tpu as pltpu


B_TILE = 8        # batch rows per grid step (sublane-friendly)
OUT_PAD = 128     # lane-dense final-output width (sliced back to output_dim)
C_ALIGN = 128     # lane-dense packed-channel alignment


# ------------------------------------------------------------------
# Fused Pallas kernel: conv (all filter sizes, both paths) + bias + ReLU +
# masked mean/max pooling + final FC.
# ------------------------------------------------------------------
def dual_path_cnn_kernel(x_ref, w_ref, tmask_ref, meta_ref, fcw_ref, fcb_ref,
                         o_ref):
    """
    x_ref    : [B_TILE, S_time_pad, E]      bf16  zero-padded embedded tokens
    w_ref    : [max_fs*E, C_pad]            bf16  packed conv weights (kernel-row major)
    tmask_ref: [S, C_pad]                   f32   1.0 where time t is a valid window for chan c
    meta_ref : [3, C_pad]                   f32   row0: conv bias, row1: 1/T_c, row2: is-avg-path
    fcw_ref  : [C_pad, OUT_PAD]             f32   final linear weight (zero-padded rows/cols)
    fcb_ref  : [1, OUT_PAD]                 f32   final linear bias (zero-padded)
    o_ref    : [B_TILE, OUT_PAD]            f32
    """
    bt = x_ref.shape[0]
    e = x_ref.shape[2]
    k_e, c = w_ref.shape
    s = tmask_ref.shape[0]
    max_fs = k_e // e

    # Build the kernel-row-unfolded LHS in VMEM: xcat[b, t, d*E + e] = x[b, t+d, e].
    # Static Python loop over max_fs (tiny); one tall matmul feeds the MXU with
    # full k = max_fs*E instead of max_fs separate k=E matmuls.
    xcat = jnp.concatenate(
        [x_ref[:, d:d + s, :] for d in range(max_fs)], axis=-1)   # [bt, s, max_fs*E] bf16
    xcat = xcat.reshape(bt * s, max_fs * e)

    acc = jnp.dot(xcat, w_ref[...],
                  preferred_element_type=jnp.float32)             # [bt*s, C_pad] f32

    meta = meta_ref[...]                                          # [3, C_pad]
    conv_b = meta[0:1, :]                                         # [1, C_pad]
    invt = meta[1:2, :]                                           # [1, C_pad]
    isavg = meta[2:3, :]                                          # [1, C_pad]

    r = acc.reshape(bt, s, c) + conv_b[None, :, :]                # bias
    r = jnp.maximum(r, 0.0)                                       # ReLU
    r = r * tmask_ref[...][None, :, :]                            # zero invalid windows

    sum_t = jnp.sum(r, axis=1)                                    # [bt, C_pad]
    max_t = jnp.max(r, axis=1)                                    # [bt, C_pad] (ReLU>=0 so 0-mask safe)

    pooled = isavg * (sum_t * invt) + (1.0 - isavg) * max_t       # [bt, C_pad]

    # Dropout: identity in eval mode.
    o_ref[...] = (
        jnp.dot(pooled, fcw_ref[...], preferred_element_type=jnp.float32)
        + fcb_ref[...]
    )


def dual_path_cnn_pallas(x_pad, w2d, tmask, meta, fc_w, fc_b):
    b_pad, s_time, e = x_pad.shape
    k_e, c_pad = w2d.shape
    s = tmask.shape[0]

    return pl.pallas_call(
        dual_path_cnn_kernel,
        out_shape=jax.ShapeDtypeStruct((b_pad, OUT_PAD), jnp.float32),
        grid_spec=pltpu.PrefetchScalarGridSpec(
            num_scalar_prefetch=0,
            grid=(b_pad // B_TILE,),
            in_specs=[
                pl.BlockSpec((B_TILE, s_time, e), lambda b: (b, 0, 0)),
                pl.BlockSpec((k_e, c_pad), lambda b: (0, 0)),
                pl.BlockSpec((s, c_pad), lambda b: (0, 0)),
                pl.BlockSpec((3, c_pad), lambda b: (0, 0)),
                pl.BlockSpec((c_pad, OUT_PAD), lambda b: (0, 0)),
                pl.BlockSpec((1, OUT_PAD), lambda b: (0, 0)),
            ],
            out_specs=pl.BlockSpec((B_TILE, OUT_PAD), lambda b: (b, 0)),
        ),
        compiler_params=pltpu.CompilerParams(
            dimension_semantics=("parallel",),
            vmem_limit_bytes=64 * 1024 * 1024,
        ),
    )(x_pad, w2d, tmask, meta, fc_w, fc_b)


# ------------------------------------------------------------------
# Parameter init (raw, PyTorch-shaped) and packing for the fused kernel.
# ------------------------------------------------------------------
def init_params(key, vocab_size, embedding_dim, n_filters, filter_sizes,
                output_dim):
    keys = jax.random.split(key, 2 + 4 * len(filter_sizes) + 2)
    k_it = iter(keys)
    params = {}
    params["embedding"] = 0.1 * jax.random.normal(
        next(k_it), (vocab_size, embedding_dim), jnp.float32)

    params["convs_avg"] = []
    params["convs_max"] = []
    for fs in filter_sizes:
        # PyTorch Conv2d weight shape: [n_filters, 1, fs, E]
        wa = 0.1 * jax.random.normal(next(k_it),
                                     (n_filters, 1, fs, embedding_dim), jnp.float32)
        ba = 0.1 * jax.random.normal(next(k_it), (n_filters,), jnp.float32)
        wm = 0.1 * jax.random.normal(next(k_it),
                                     (n_filters, 1, fs, embedding_dim), jnp.float32)
        bm = 0.1 * jax.random.normal(next(k_it), (n_filters,), jnp.float32)
        params["convs_avg"].append((wa, ba))
        params["convs_max"].append((wm, bm))

    d_in = len(filter_sizes) * n_filters * 2
    params["fc_w"] = 0.1 * jax.random.normal(next(k_it), (output_dim, d_in),
                                             jnp.float32)   # [O, D] PyTorch layout
    params["fc_b"] = 0.1 * jax.random.normal(next(k_it), (output_dim,),
                                             jnp.float32)
    return params


def pack_params(params, filter_sizes):
    """Pack raw PyTorch-shaped params into the fused-kernel layout.

    Channel order matches torch.cat(avg_pooled + max_pooled, dim=1):
      [avg_fs0 | avg_fs1 | ... | max_fs0 | max_fs1 | ...], each n_filters wide,
    then zero-padded to a multiple of 128 lanes.
    """
    n_fs = len(filter_sizes)
    max_fs = max(filter_sizes)
    f = params["convs_avg"][0][0].shape[0]          # n_filters
    e = params["embedding"].shape[1]
    c = 2 * n_fs * f
    c_pad = ((c + C_ALIGN - 1) // C_ALIGN) * C_ALIGN
    out_dim = params["fc_w"].shape[0]

    # conv[b,f,t] = sum_{d,e} w[f,0,d,e] * x[b,t+d,e]
    #   -> W2d[d*E + e, chan] = w[chan_filter, 0, d, e]
    w2d = jnp.zeros((max_fs * e, c_pad), jnp.float32)
    conv_b = jnp.zeros((c_pad,), jnp.float32)
    for path, convs in enumerate((params["convs_avg"], params["convs_max"])):
        for i, (w, b) in enumerate(convs):
            fs = filter_sizes[i]
            col = (path * n_fs + i) * f
            for d in range(fs):
                w2d = w2d.at[d * e:(d + 1) * e, col:col + f].set(w[:, 0, d, :].T)
            conv_b = conv_b.at[col:col + f].set(b)

    fc_w = jnp.zeros((c_pad, OUT_PAD), jnp.float32)
    fc_w = fc_w.at[:c, :out_dim].set(params["fc_w"].T)        # [D, O] into padded block
    fc_b = jnp.zeros((1, OUT_PAD), jnp.float32)
    fc_b = fc_b.at[0, :out_dim].set(params["fc_b"])

    return {
        "embedding": params["embedding"],
        "conv_w": w2d.astype(jnp.bfloat16),    # [max_fs*E, C_pad]
        "conv_b": conv_b,                      # [C_pad]
        "fc_w": fc_w,                          # [C_pad, OUT_PAD]
        "fc_b": fc_b,                          # [1, OUT_PAD]
    }


# ------------------------------------------------------------------
# Forward pass
# ------------------------------------------------------------------
@functools.partial(jax.jit,
                   static_argnames=("filter_sizes", "n_filters", "output_dim"))
def dual_path_cnn_forward(packed, text, filter_sizes, n_filters, output_dim):
    b, s = text.shape
    n_fs = len(filter_sizes)
    max_fs = max(filter_sizes)
    f = n_filters
    c_pad = packed["conv_w"].shape[1]

    # Embedding lookup (gather) — glue in plain JAX; MXU inputs in bf16.
    embedded = packed["embedding"][text].astype(jnp.bfloat16)   # [B, S, E]

    # Pad batch to a multiple of B_TILE; pad time so all max_fs window shifts
    # exist and the sublane dim is a multiple of 8 (invalid windows are masked
    # inside the kernel).
    b_pad = ((b + B_TILE - 1) // B_TILE) * B_TILE
    s_time = ((s + max_fs - 1 + 7) // 8) * 8
    x_pad = jnp.pad(embedded, ((0, b_pad - b), (0, s_time - s), (0, 0)))

    # Per-channel metadata (constant-folded under jit: s, filter_sizes static).
    t_per_ch = []
    for _path in range(2):
        for fs in filter_sizes:
            t_per_ch += [s - fs + 1] * f
    t_per_ch += [1] * (c_pad - len(t_per_ch))                   # pad channels: dummy T=1
    t_per_ch = jnp.asarray(t_per_ch, jnp.float32)               # [C_pad]
    tmask = (jnp.arange(s, dtype=jnp.float32)[:, None]
             < t_per_ch[None, :]).astype(jnp.float32)           # [S, C_pad]
    invt = 1.0 / t_per_ch                                       # [C_pad]
    isavg = jnp.zeros((c_pad,), jnp.float32).at[:n_fs * f].set(1.0)
    meta = jnp.stack([packed["conv_b"], invt, isavg], axis=0)   # [3, C_pad]

    out = dual_path_cnn_pallas(x_pad, packed["conv_w"], tmask, meta,
                               packed["fc_w"], packed["fc_b"])
    return out[:b, :output_dim]


# ------------------------------------------------------------------
# Pure-JAX reference (mirrors the PyTorch module; bf16 matmul inputs to
# match the kernel's MXU precision).
# ------------------------------------------------------------------
def reference_forward(params, text, filter_sizes):
    emb = params["embedding"][text].astype(jnp.bfloat16)        # [B, S, E]
    b, s, e = emb.shape
    avg_pooled, max_pooled = [], []
    for i, fs in enumerate(filter_sizes):
        t = s - fs + 1
        windows = jnp.stack([emb[:, j:j + fs, :] for j in range(t)], axis=1)
        windows = windows.reshape(b, t, fs * e)
        for path, convs in ((0, params["convs_avg"]), (1, params["convs_max"])):
            w, bias = convs[i]
            wk = w.reshape(w.shape[0], fs * e).T.astype(jnp.bfloat16)  # [fs*E, F]
            y = jnp.einsum("btk,kf->btf", windows, wk,
                           preferred_element_type=jnp.float32) + bias[None, None, :]
            y = jnp.maximum(y, 0.0)
            if path == 0:
                avg_pooled.append(jnp.mean(y, axis=1))
            else:
                max_pooled.append(jnp.max(y, axis=1))
    cat = jnp.concatenate(avg_pooled + max_pooled, axis=1)
    return cat @ params["fc_w"].T + params["fc_b"][None, :]


if __name__ == "__main__":
    vocab_size = 50
    embedding_dim = 32
    n_filters = 8
    filter_sizes = (2, 3, 4)
    output_dim = 4
    batch, seq = 2, 16

    key = jax.random.PRNGKey(0)
    k_params, k_text = jax.random.split(key)
    params = init_params(k_params, vocab_size, embedding_dim, n_filters,
                         filter_sizes, output_dim)
    packed = pack_params(params, filter_sizes)
    text = jax.random.randint(k_text, (batch, seq), 0, vocab_size,
                              dtype=jnp.int32)

    out = dual_path_cnn_forward(packed, text, filter_sizes, n_filters,
                                output_dim)
    out = jax.block_until_ready(out)
    assert out.shape == (batch, output_dim)

    ref = reference_forward(params, text, filter_sizes)
    max_err = float(jnp.max(jnp.abs(out - ref)))
    assert jnp.allclose(out, ref, atol=1e-3, rtol=1e-3), max_err

    print("KERNEL_OK")
</pallas_src>

<mosaic_0001>
module attributes {stable_mosaic.version = 11 : i64} {
  func.func @dual_path_cnn_kernel(%arg0: i32, %arg1: memref<8x24x32xbf16, #tpu.memory_space<vmem>>, %arg2: memref<128x128xbf16, #tpu.memory_space<vmem>>, %arg3: memref<16x128xf32, #tpu.memory_space<vmem>>, %arg4: memref<3x128xf32, #tpu.memory_space<vmem>>, %arg5: memref<128x128xf32, #tpu.memory_space<vmem>>, %arg6: memref<1x128xf32, #tpu.memory_space<vmem>>, %arg7: memref<8x128xf32, #tpu.memory_space<vmem>>) attributes {dimension_semantics = [#tpu.dimension_semantics<parallel>], iteration_bounds = array<i64: 1>, scalar_prefetch = 0 : i64, scratch_operands = 0 : i64, tpu.core_type = #tpu.core_type<tc>, window_params = [{transform_indices = @transform_0, window_bounds = array<i64: 8, 24, 32>}, {pipeline_mode = #tpu.pipeline_mode<synchronous>, transform_indices = @transform_1, window_bounds = array<i64: 128, 128>}, {pipeline_mode = #tpu.pipeline_mode<synchronous>, transform_indices = @transform_2, window_bounds = array<i64: 16, 128>}, {pipeline_mode = #tpu.pipeline_mode<synchronous>, transform_indices = @transform_3, window_bounds = array<i64: 3, 128>}, {pipeline_mode = #tpu.pipeline_mode<synchronous>, transform_indices = @transform_4, window_bounds = array<i64: 128, 128>}, {pipeline_mode = #tpu.pipeline_mode<synchronous>, transform_indices = @transform_5, window_bounds = array<i64: 1, 128>}, {transform_indices = @transform_6, window_bounds = array<i64: 8, 128>}]} {
    %c0 = arith.constant 0 : index
    %c0_0 = arith.constant 0 : index
    %c0_1 = arith.constant 0 : index
    %0 = vector.load %arg1[%c0, %c0_0, %c0_1] : memref<8x24x32xbf16, #tpu.memory_space<vmem>>, vector<8x16x32xbf16>
    %c0_2 = arith.constant 0 : index
    %c1 = arith.constant 1 : index
    %c0_3 = arith.constant 0 : index
    %1 = vector.load %arg1[%c0_2, %c1, %c0_3] : memref<8x24x32xbf16, #tpu.memory_space<vmem>>, vector<8x16x32xbf16>
    %c0_4 = arith.constant 0 : index
    %c2 = arith.constant 2 : index
    %c0_5 = arith.constant 0 : index
    %2 = vector.load %arg1[%c0_4, %c2, %c0_5] : memref<8x24x32xbf16, #tpu.memory_space<vmem>>, vector<8x16x32xbf16>
    %c0_6 = arith.constant 0 : index
    %c3 = arith.constant 3 : index
    %c0_7 = arith.constant 0 : index
    %3 = vector.load %arg1[%c0_6, %c3, %c0_7] : memref<8x24x32xbf16, #tpu.memory_space<vmem>>, vector<8x16x32xbf16>
    %4 = tpu.concatenate %0, %1, %2, %3 in 2 : vector<8x16x32xbf16>, vector<8x16x32xbf16>, vector<8x16x32xbf16>, vector<8x16x32xbf16> -> vector<8x16x128xbf16>
    %5 = vector.shape_cast %4 : vector<8x16x128xbf16> to vector<128x128xbf16>
    %c0_8 = arith.constant 0 : index
    %c0_9 = arith.constant 0 : index
    %6 = vector.load %arg2[%c0_8, %c0_9] : memref<128x128xbf16, #tpu.memory_space<vmem>>, vector<128x128xbf16>
    %cst = arith.constant dense<0.000000e+00> : vector<128x128xf32>
    %7 = tpu.matmul %5, %6, %cst {dimension_numbers = #tpu.dot_dimension_numbers<[1], [0], [0], [1], [0, 0, 1, 1], [], []>} : vector<128x128xbf16>, vector<128x128xbf16>, vector<128x128xf32> -> vector<128x128xf32>
    %c0_10 = arith.constant 0 : index
    %c0_11 = arith.constant 0 : index
    %8 = vector.load %arg4[%c0_10, %c0_11] : memref<3x128xf32, #tpu.memory_space<vmem>>, vector<3x128xf32>
    %9 = vector.extract_strided_slice %8 {offsets = [0, 0], sizes = [1, 128], strides = [1, 1]} : vector<3x128xf32> to vector<1x128xf32>
    %10 = vector.extract_strided_slice %8 {offsets = [1, 0], sizes = [1, 128], strides = [1, 1]} : vector<3x128xf32> to vector<1x128xf32>
    %11 = vector.extract_strided_slice %8 {offsets = [2, 0], sizes = [1, 128], strides = [1, 1]} : vector<3x128xf32> to vector<1x128xf32>
    %12 = vector.shape_cast %7 : vector<128x128xf32> to vector<8x16x128xf32>
    %13 = vector.shape_cast %9 : vector<1x128xf32> to vector<1x1x128xf32>
    %14 = vector.broadcast %13 : vector<1x1x128xf32> to vector<8x16x128xf32>
    %15 = arith.addf %12, %14 : vector<8x16x128xf32>
    %cst_12 = arith.constant 0.000000e+00 : f32
    %16 = vector.broadcast %cst_12 : f32 to vector<8x16x128xf32>
    %17 = arith.maximumf %15, %16 : vector<8x16x128xf32>
    %c0_13 = arith.constant 0 : index
    %c0_14 = arith.constant 0 : index
    %18 = vector.load %arg3[%c0_13, %c0_14] : memref<16x128xf32, #tpu.memory_space<vmem>>, vector<16x128xf32>
    %19 = vector.shape_cast %18 : vector<16x128xf32> to vector<1x16x128xf32>
    %20 = vector.broadcast %19 : vector<1x16x128xf32> to vector<8x16x128xf32>
    %21 = arith.mulf %17, %20 : vector<8x16x128xf32>
    %cst_15 = arith.constant dense<0.000000e+00> : vector<8x128xf32>
    %22 = vector.multi_reduction <add>, %21, %cst_15 [1] : vector<8x16x128xf32> to vector<8x128xf32>
    %cst_16 = arith.constant dense<0xFF800000> : vector<8x128xf32>
    %23 = vector.multi_reduction <maximumf>, %21, %cst_16 [1] : vector<8x16x128xf32> to vector<8x128xf32>
    %24 = vector.broadcast %10 : vector<1x128xf32> to vector<8x128xf32>
    %25 = arith.mulf %22, %24 : vector<8x128xf32>
    %26 = vector.broadcast %11 : vector<1x128xf32> to vector<8x128xf32>
    %27 = arith.mulf %26, %25 : vector<8x128xf32>
    %cst_17 = arith.constant 1.000000e+00 : f32
    %28 = vector.broadcast %cst_17 : f32 to vector<1x128xf32>
    %29 = arith.subf %28, %11 : vector<1x128xf32>
    %30 = vector.broadcast %29 : vector<1x128xf32> to vector<8x128xf32>
    %31 = arith.mulf %30, %23 : vector<8x128xf32>
    %32 = arith.addf %27, %31 : vector<8x128xf32>
    %c0_18 = arith.constant 0 : index
    %c0_19 = arith.constant 0 : index
    %33 = vector.load %arg5[%c0_18, %c0_19] : memref<128x128xf32, #tpu.memory_space<vmem>>, vector<128x128xf32>
    %cst_20 = arith.constant dense<0.000000e+00> : vector<8x128xf32>
    %34 = tpu.matmul %32, %33, %cst_20 {dimension_numbers = #tpu.dot_dimension_numbers<[1], [0], [0], [1], [0, 0, 1, 1], [], []>} : vector<8x128xf32>, vector<128x128xf32>, vector<8x128xf32> -> vector<8x128xf32>
    %c0_21 = arith.constant 0 : index
    %c0_22 = arith.constant 0 : index
    %35 = vector.load %arg6[%c0_21, %c0_22] : memref<1x128xf32, #tpu.memory_space<vmem>>, vector<1x128xf32>
    %36 = vector.broadcast %35 : vector<1x128xf32> to vector<8x128xf32>
    %37 = arith.addf %34, %36 : vector<8x128xf32>
    %c0_23 = arith.constant 0 : index
    %c0_24 = arith.constant 0 : index
    %38 = vector.load %arg7[%c0_23, %c0_24] : memref<8x128xf32, #tpu.memory_space<vmem>>, vector<8x128xf32>
    tpu.vector_store %arg7[%c0_23, %c0_24], %37 {strides = array<i32>} : memref<8x128xf32, #tpu.memory_space<vmem>>, vector<8x128xf32>,
    return
  }
  func.func @transform_0(%arg0: i32) -> (i32, i32, i32) {
    %c0_i32 = arith.constant 0 : i32
    %c0_i32_0 = arith.constant 0 : i32
    %c0_i32_1 = arith.constant 0 : i32
    return %arg0, %c0_i32, %c0_i32_0 : i32, i32, i32
  }
  func.func @transform_1(%arg0: i32) -> (i32, i32) {
    %c0_i32 = arith.constant 0 : i32
    %c0_i32_0 = arith.constant 0 : i32
    %c0_i32_1 = arith.constant 0 : i32
    return %c0_i32, %c0_i32_0 : i32, i32
  }
  func.func @transform_2(%arg0: i32) -> (i32, i32) {
    %c0_i32 = arith.constant 0 : i32
    %c0_i32_0 = arith.constant 0 : i32
    %c0_i32_1 = arith.constant 0 : i32
    return %c0_i32, %c0_i32_0 : i32, i32
  }
  func.func @transform_3(%arg0: i32) -> (i32, i32) {
    %c0_i32 = arith.constant 0 : i32
    %c0_i32_0 = arith.constant 0 : i32
    %c0_i32_1 = arith.constant 0 : i32
    return %c0_i32, %c0_i32_0 : i32, i32
  }
  func.func @transform_4(%arg0: i32) -> (i32, i32) {
    %c0_i32 = arith.constant 0 : i32
    %c0_i32_0 = arith.constant 0 : i32
    %c0_i32_1 = arith.constant 0 : i32
    return %c0_i32, %c0_i32_0 : i32, i32
  }
  func.func @transform_5(%arg0: i32) -> (i32, i32) {
    %c0_i32 = arith.constant 0 : i32
    %c0_i32_0 = arith.constant 0 : i32
    %c0_i32_1 = arith.constant 0 : i32
    return %c0_i32, %c0_i32_0 : i32, i32
  }
  func.func @transform_6(%arg0: i32) -> (i32, i32) {
    %c0_i32 = arith.constant 0 : i32
    %c0_i32_0 = arith.constant 0 : i32
    return %arg0, %c0_i32 : i32, i32
  }
}

</mosaic_0001>

<llo_original>
// kernel: dual_path_cnn_forward.1
$region0: #{dual_path_cnn_forward.1}
  #allocation0 [shape = 'u32[]', space=smem, size = 0x4, offset = 0x4, fixed_abs, tag = 'smem constant byte address 0x4 - core index']
  #allocation1 [shape = 'u32[144,128]{1,0:T(1,128)}', space=vmem, size = 0x12000, scoped, tag = 'internal scratch']
  %s0 = inlined_call_operand.hbm [shape: bf16[8,24,32], index: 0, kind: input, shape index: {}]
  %s1 = inlined_call_operand.hbm [shape: bf16[128,128], index: 1, kind: input, shape index: {}]
  %s2 = inlined_call_operand.hbm [shape: f32[16,128], index: 2, kind: input, shape index: {}]
  %s3 = inlined_call_operand.hbm [shape: f32[3,128], index: 3, kind: input, shape index: {}]
  %s4 = inlined_call_operand.hbm [shape: f32[128,128], index: 4, kind: input, shape index: {}]
  %s5 = inlined_call_operand.hbm [shape: f32[1,128], index: 5, kind: input, shape index: {}]
  %s6 = inlined_call_operand.hbm [shape: f32[8,128], index: 6, kind: output, shape index: {}]
  %s7 = sld [smem:[#allocation0]]
  $region58: #{dual_path_cnn_forward.1} parent=0
    _
  %s9 = ssub.s32 1, %s7
  %s10 = scalar_select 0, %s9, %s7
  $region1: #{dual_path_cnn_forward.1} parent=0
    #allocation2 [shape = 'u8[49152]{0}', space=vmem, size = 0xc000, scoped, tag = 'input window, operand 0, single buffered']
    #allocation3 [shape = 's32[1]{0}', space=sflag, size = 0x4, scoped, tag = 'scoped memory for dual_path_cnn_forward.1']
    #allocation4 [shape = 's32[1]{0}', space=sflag, size = 0x4, scoped, tag = 'scoped memory for dual_path_cnn_forward.1']
    #allocation5 [shape = 'u8[32768]{0}', space=vmem, size = 0x8000, scoped, tag = 'input window, operand 1, single buffered']
    #allocation6 [shape = 's32[1]{0}', space=sflag, size = 0x4, scoped, tag = 'scoped memory for dual_path_cnn_forward.1']
    #allocation7 [shape = 'u8[8192]{0}', space=vmem, size = 0x2000, scoped, tag = 'input window, operand 2, single buffered']
    #allocation8 [shape = 'u8[2048]{0}', space=vmem, size = 0x800, scoped, tag = 'input window, operand 3, single buffered']
    #allocation9 [shape = 's32[1]{0}', space=sflag, size = 0x4, scoped, tag = 'scoped memory for dual_path_cnn_forward.1']
    #allocation10 [shape = 'u8[65536]{0}', space=vmem, size = 0x10000, scoped, tag = 'input window, operand 4, single buffered']
    #allocation11 [shape = 'u8[512]{0}', space=vmem, size = 0x400, scoped, tag = 'input window, operand 5, single buffered']
    #allocation12 [shape = 's32[1]{0}', space=sflag, size = 0x4, scoped, tag = 'scoped memory for dual_path_cnn_forward.1']
    #allocation13 [shape = 'u8[4096]{0}', space=vmem, size = 0x1000, scoped, tag = 'output window, operand 0, single buffered']
    %11 = vsyncpa [#allocation3], 0
    %12 = vsyncpa [#allocation6], 0
    %13 = vsyncpa [#allocation9], 0
    %14 = vsyncpa [#allocation12], 0
    %15 = vsyncpa [#allocation4], 0
    // Predicated region
    $region2: #{dual_path_cnn_forward.1} parent=1 // pred_check
      _
    $region3: #{dual_path_cnn_forward.1} parent=1 // pred_check_branch
      %17 = sbr.rel (0) target = $region5
    $region4: #{dual_path_cnn_forward.1} parent=1 // pred_region
      %s19 = ssub.s32 1536, 1536
      %20 = vsyncadd [#allocation3], %s19
      %s21 = sshll.u32 [#allocation2], 4
      %s22 = int_to_ptr.vmem [resolvable:$true] %s21
      %27 = dma.hbm_to_vmem [thread:$0]  %s0, 1536, %s22, [#allocation3], 64, 64, 4
    $region5: #{dual_path_cnn_forward.1} parent=1 // pred_fallthru
      _
    // Predicated region
    $region6: #{dual_path_cnn_forward.1} parent=1 // pred_check
      _
    $region7: #{dual_path_cnn_forward.1} parent=1 // pred_check_branch
      %29 = sbr.rel (0) target = $region9
    $region8: #{dual_path_cnn_forward.1} parent=1 // pred_region
      %s31 = ssub.s32 1024, 1024
      %32 = vsyncadd [#allocation6], %s31
      %s33 = sshll.u32 [#allocation5], 4
      %s34 = int_to_ptr.vmem [resolvable:$true] %s33
      %39 = dma.hbm_to_vmem [thread:$0]  %s1, 1024, %s34, [#allocation6], 64, 64, 4
    $region9: #{dual_path_cnn_forward.1} parent=1 // pred_fallthru
      _
    // Predicated region
    $region10: #{dual_path_cnn_forward.1} parent=1 // pred_check
      _
    $region11: #{dual_path_cnn_forward.1} parent=1 // pred_check_branch
      %41 = sbr.rel (0) target = $region13
    $region12: #{dual_path_cnn_forward.1} parent=1 // pred_region
      %s43 = ssub.s32 256, 256
      %44 = vsyncadd [#allocation6], %s43
      %s45 = sshll.u32 [#allocation7], 4
      %s46 = int_to_ptr.vmem [resolvable:$true] %s45
      %51 = dma.hbm_to_vmem [thread:$0]  %s2, 256, %s46, [#allocation6], 128, 128, 8
    $region13: #{dual_path_cnn_forward.1} parent=1 // pred_fallthru
      _
    // Predicated region
    $region14: #{dual_path_cnn_forward.1} parent=1 // pred_check
      _
    $region15: #{dual_path_cnn_forward.1} parent=1 // pred_check_branch
      %53 = sbr.rel (0) target = $region17
    $region16: #{dual_path_cnn_forward.1} parent=1 // pred_region
      %s55 = ssub.s32 64, 64
      %56 = vsyncadd [#allocation9], %s55
      %s58 = sshll.u32 [#allocation8], 4
      %s59 = int_to_ptr.vmem [resolvable:$true] %s58
      %61 = dma.hbm_to_vmem [thread:$0]  %s3, 64, %s59, [#allocation9]
    $region17: #{dual_path_cnn_forward.1} parent=1 // pred_fallthru
      _
    // Predicated region
    $region18: #{dual_path_cnn_forward.1} parent=1 // pred_check
      _
    $region19: #{dual_path_cnn_forward.1} parent=1 // pred_check_branch
      %63 = sbr.rel (0) target = $region21
    $region20: #{dual_path_cnn_forward.1} parent=1 // pred_region
      %s65 = ssub.s32 2048, 2048
      %66 = vsyncadd [#allocation9], %s65
      %s67 = sshll.u32 [#allocation10], 4
      %s68 = int_to_ptr.vmem [resolvable:$true] %s67
      %73 = dma.hbm_to_vmem [thread:$0]  %s4, 2048, %s68, [#allocation9], 128, 128, 8
    $region21: #{dual_path_cnn_forward.1} parent=1 // pred_fallthru
      _
    // Predicated region
    $region22: #{dual_path_cnn_forward.1} parent=1 // pred_check
      _
    $region23: #{dual_path_cnn_forward.1} parent=1 // pred_check_branch
      %75 = sbr.rel (0) target = $region25
    $region24: #{dual_path_cnn_forward.1} parent=1 // pred_region
      %s77 = ssub.s32 16, 16
      %78 = vsyncadd [#allocation12], %s77
      %s80 = sshll.u32 [#allocation11], 4
      %s81 = int_to_ptr.vmem [resolvable:$true] %s80
      %83 = dma.hbm_to_vmem [thread:$0]  %s5, 16, %s81, [#allocation12]
    $region25: #{dual_path_cnn_forward.1} parent=1 // pred_fallthru
      _
    // Predicated region
    $region26: #{dual_path_cnn_forward.1} parent=1 // pred_check
      _
    $region27: #{dual_path_cnn_forward.1} parent=1 // pred_check_branch
      %85 = sbr.rel (0) target = $region29
    $region28: #{dual_path_cnn_forward.1} parent=1 // pred_region
      %86 = dma.done [#allocation3], 1536
    $region29: #{dual_path_cnn_forward.1} parent=1 // pred_fallthru
      _
    // Predicated region
    $region30: #{dual_path_cnn_forward.1} parent=1 // pred_check
      _
    $region31: #{dual_path_cnn_forward.1} parent=1 // pred_check_branch
      %88 = sbr.rel (0) target = $region33
    $region32: #{dual_path_cnn_forward.1} parent=1 // pred_region
      %89 = dma.done [#allocation6], 1024
    $region33: #{dual_path_cnn_forward.1} parent=1 // pred_fallthru
      _
    // Predicated region
    $region34: #{dual_path_cnn_forward.1} parent=1 // pred_check
      _
    $region35: #{dual_path_cnn_forward.1} parent=1 // pred_check_branch
      %91 = sbr.rel (0) target = $region37
    $region36: #{dual_path_cnn_forward.1} parent=1 // pred_region
      %92 = dma.done [#allocation6], 256
    $region37: #{dual_path_cnn_forward.1} parent=1 // pred_fallthru
      _
    // Predicated region
    $region38: #{dual_path_cnn_forward.1} parent=1 // pred_check
      _
    $region39: #{dual_path_cnn_forward.1} parent=1 // pred_check_branch
      %94 = sbr.rel (0) target = $region41
    $region40: #{dual_path_cnn_forward.1} parent=1 // pred_region
      %95 = dma.done [#allocation9], 64
    $region41: #{dual_path_cnn_forward.1} parent=1 // pred_fallthru
      _
    // Predicated region
    $region42: #{dual_path_cnn_forward.1} parent=1 // pred_check
      _
    $region43: #{dual_path_cnn_forward.1} parent=1 // pred_check_branch
      %97 = sbr.rel (0) target = $region45
    $region44: #{dual_path_cnn_forward.1} parent=1 // pred_region
      %98 = dma.done [#allocation9], 2048
    $region45: #{dual_path_cnn_forward.1} parent=1 // pred_fallthru
      _
    // Predicated region
    $region46: #{dual_path_cnn_forward.1} parent=1 // pred_check
      _
    $region47: #{dual_path_cnn_forward.1} parent=1 // pred_check_branch
      %100 = sbr.rel (0) target = $region49
    $region48: #{dual_path_cnn_forward.1} parent=1 // pred_region
      %101 = dma.done [#allocation12], 16
    $region49: #{dual_path_cnn_forward.1} parent=1 // pred_fallthru
      _
    %v103 = vld [vmem:[#allocation2] sm:$0xf]
    %v104 = vld [vmem:[#allocation2 + $0x4] sm:$0xf]
    %v105 = vld [vmem:[#allocation2 + $0xc] sm:$0xf]
    %v106 = vld [vmem:[#allocation2 + $0x10] sm:$0xf]
    %v107 = vld [vmem:[#allocation2 + $0x18] sm:$0xf]
    %v108 = vld [vmem:[#allocation2 + $0x1c] sm:$0xf]
    %v109 = vld [vmem:[#allocation2 + $0x24] sm:$0xf]
    %v110 = vld [vmem:[#allocation2 + $0x28] sm:$0xf]
    %v111 = vld [vmem:[#allocation2 + $0x30] sm:$0xf]
    %v112 = vld [vmem:[#allocation2 + $0x34] sm:$0xf]
    %v113 = vld [vmem:[#allocation2 + $0x3c] sm:$0xf]
    %v114 = vld [vmem:[#allocation2 + $0x40] sm:$0xf]
    %v115 = vld [vmem:[#allocation2 + $0x48] sm:$0xf]
    %v116 = vld [vmem:[#allocation2 + $0x4c] sm:$0xf]
    %v117 = vld [vmem:[#allocation2 + $0x54] sm:$0xf]
    %v118 = vld [vmem:[#allocation2 + $0x58] sm:$0xf]
    %v119 = vld [vmem:[#allocation2 + $0x8] sm:$0x1]
    %v120 = vld [vmem:[#allocation2 + $0x14] sm:$0x1]
    %v121 = vld [vmem:[#allocation2 + $0x20] sm:$0x1]
    %v122 = vld [vmem:[#allocation2 + $0x2c] sm:$0x1]
    %v123 = vld [vmem:[#allocation2 + $0x38] sm:$0x1]
    %v124 = vld [vmem:[#allocation2 + $0x44] sm:$0x1]
    %v125 = vld [vmem:[#allocation2 + $0x50] sm:$0x1]
    %v126 = vld [vmem:[#allocation2 + $0x5c] sm:$0x1]
    %v127 = vld [vmem:[#allocation2] sm:$0xe]
    %v128 = vld [vmem:[#allocation2 + $0xc] sm:$0xe]
    %v129 = vld [vmem:[#allocation2 + $0x18] sm:$0xe]
    %v130 = vld [vmem:[#allocation2 + $0x24] sm:$0xe]
    %v131 = vld [vmem:[#allocation2 + $0x30] sm:$0xe]
    %v132 = vld [vmem:[#allocation2 + $0x3c] sm:$0xe]
    %v133 = vld [vmem:[#allocation2 + $0x48] sm:$0xe]
    %v134 = vld [vmem:[#allocation2 + $0x54] sm:$0xe]
    %v135 = vld [vmem:[#allocation2 + $0x8] sm:$0x3]
    %v136 = vld [vmem:[#allocation2 + $0x14] sm:$0x3]
    %v137 = vld [vmem:[#allocation2 + $0x20] sm:$0x3]
    %v138 = vld [vmem:[#allocation2 + $0x2c] sm:$0x3]
    %v139 = vld [vmem:[#allocation2 + $0x38] sm:$0x3]
    %v140 = vld [vmem:[#allocation2 + $0x44] sm:$0x3]
    %v141 = vld [vmem:[#allocation2 + $0x50] sm:$0x3]
    %v142 = vld [vmem:[#allocation2 + $0x5c] sm:$0x3]
    %v159 = vunpack.c.l.b16 %v103
    %v160 = vunpack.c.l.b16 %v104
    %v161 = vunpack.c.l.b16 %v105
    %v162 = vunpack.c.l.b16 %v106
    %v163 = vunpack.c.l.b16 %v107
    %v164 = vunpack.c.l.b16 %v108
    %v165 = vunpack.c.l.b16 %v109
    %v166 = vunpack.c.l.b16 %v110
    %v167 = vunpack.c.l.b16 %v111
    %v168 = vunpack.c.l.b16 %v112
    %v169 = vunpack.c.l.b16 %v113
    %v170 = vunpack.c.l.b16 %v114
    %v171 = vunpack.c.l.b16 %v115
    %v172 = vunpack.c.l.b16 %v116
    %v173 = vunpack.c.l.b16 %v117
    %v174 = vunpack.c.l.b16 %v118
    %v175 = vpack.c.b16 %v160, %v159
    %v176 = vpack.c.b16 %v162, %v161
    %v177 = vpack.c.b16 %v164, %v163
    %v178 = vpack.c.b16 %v166, %v165
    %v179 = vpack.c.b16 %v168, %v167
    %v180 = vpack.c.b16 %v170, %v169
    %v181 = vpack.c.b16 %v172, %v171
    %v182 = vpack.c.b16 %v174, %v173
    %v191 = vunpack.c.l.b16 %v119
    %v192 = vunpack.c.l.b16 %v120
    %v193 = vunpack.c.l.b16 %v121
    %v194 = vunpack.c.l.b16 %v122
    %v195 = vunpack.c.l.b16 %v123
    %v196 = vunpack.c.l.b16 %v124
    %v197 = vunpack.c.l.b16 %v125
    %v198 = vunpack.c.l.b16 %v126
    %v199 = vpack.c.b16 %v191, %v191
    %v200 = vpack.c.b16 %v192, %v192
    %v201 = vpack.c.b16 %v193, %v193
    %v202 = vpack.c.b16 %v194, %v194
    %v203 = vpack.c.b16 %v195, %v195
    %v204 = vpack.c.b16 %v196, %v196
    %v205 = vpack.c.b16 %v197, %v197
    %v206 = vpack.c.b16 %v198, %v198
    %vm207 = vsmask.f32 7424
    %v209 = vshrl.u32 %v175, 16
    %v211 = vshll.u32 %v175, 16
    %v213 = vrot.slane %v211, 1
    %v214 = vor.u32 %v209, %v213
    %v216 = vshll.u32 %v199, 16
    %v218 = vrot.slane %v216, 1
    %v219 = vsel %vm207, %v214, %v218
    %v221 = vshrl.u32 %v176, 16
    %v223 = vshll.u32 %v176, 16
    %v225 = vrot.slane %v223, 1
    %v226 = vor.u32 %v221, %v225
    %v228 = vshll.u32 %v200, 16
    %v230 = vrot.slane %v228, 1
    %v231 = vsel %vm207, %v226, %v230
    %v233 = vshrl.u32 %v177, 16
    %v235 = vshll.u32 %v177, 16
    %v237 = vrot.slane %v235, 1
    %v238 = vor.u32 %v233, %v237
    %v240 = vshll.u32 %v201, 16
    %v242 = vrot.slane %v240, 1
    %v243 = vsel %vm207, %v238, %v242
    %v245 = vshrl.u32 %v178, 16
    %v247 = vshll.u32 %v178, 16
    %v249 = vrot.slane %v247, 1
    %v250 = vor.u32 %v245, %v249
    %v252 = vshll.u32 %v202, 16
    %v254 = vrot.slane %v252, 1
    %v255 = vsel %vm207, %v250, %v254
    %v257 = vshrl.u32 %v179, 16
    %v259 = vshll.u32 %v179, 16
    %v261 = vrot.slane %v259, 1
    %v262 = vor.u32 %v257, %v261
    %v264 = vshll.u32 %v203, 16
    %v266 = vrot.slane %v264, 1
    %v267 = vsel %vm207, %v262, %v266
    %v269 = vshrl.u32 %v180, 16
    %v271 = vshll.u32 %v180, 16
    %v273 = vrot.slane %v271, 1
    %v274 = vor.u32 %v269, %v273
    %v276 = vshll.u32 %v204, 16
    %v278 = vrot.slane %v276, 1
    %v279 = vsel %vm207, %v274, %v278
    %v281 = vshrl.u32 %v181, 16
    %v283 = vshll.u32 %v181, 16
    %v285 = vrot.slane %v283, 1
    %v286 = vor.u32 %v281, %v285
    %v288 = vshll.u32 %v205, 16
    %v290 = vrot.slane %v288, 1
    %v291 = vsel %vm207, %v286, %v290
    %v293 = vshrl.u32 %v182, 16
    %v295 = vshll.u32 %v182, 16
    %v297 = vrot.slane %v295, 1
    %v298 = vor.u32 %v293, %v297
    %v300 = vshll.u32 %v206, 16
    %v302 = vrot.slane %v300, 1
    %v303 = vsel %vm207, %v298, %v302
    %304 = vrot.lane.b32.xlu0 %v219, 32
    %v305 = vpop.permute.xlu0 %304
    %306 = vrot.lane.b32.xlu0 %v231, 32
    %v307 = vpop.permute.xlu0 %306
    %308 = vrot.lane.b32.xlu0 %v243, 32
    %v309 = vpop.permute.xlu0 %308
    %310 = vrot.lane.b32.xlu0 %v255, 32
    %v311 = vpop.permute.xlu0 %310
    %312 = vrot.lane.b32.xlu0 %v267, 32
    %v313 = vpop.permute.xlu0 %312
    %314 = vrot.lane.b32.xlu0 %v279, 32
    %v315 = vpop.permute.xlu0 %314
    %316 = vrot.lane.b32.xlu0 %v291, 32
    %v317 = vpop.permute.xlu0 %316
    %318 = vrot.lane.b32.xlu0 %v303, 32
    %v319 = vpop.permute.xlu0 %318
    %v328 = vunpack.c.l.b16 %v127
    %v329 = vunpack.c.l.b16 %v128
    %v330 = vunpack.c.l.b16 %v129
    %v331 = vunpack.c.l.b16 %v130
    %v332 = vunpack.c.l.b16 %v131
    %v333 = vunpack.c.l.b16 %v132
    %v334 = vunpack.c.l.b16 %v133
    %v335 = vunpack.c.l.b16 %v134
    %v336 = vpack.c.b16 %v160, %v328
    %v337 = vpack.c.b16 %v162, %v329
    %v338 = vpack.c.b16 %v164, %v330
    %v339 = vpack.c.b16 %v166, %v331
    %v340 = vpack.c.b16 %v168, %v332
    %v341 = vpack.c.b16 %v170, %v333
    %v342 = vpack.c.b16 %v172, %v334
    %v343 = vpack.c.b16 %v174, %v335
    %vm344 = vcmask 1046528
    %v345 = vrot.slane %v336, 1
    %v346 = vrot.slane %v199, 1
    %v347 = vsel %vm344, %v345, %v346
    %v348 = vrot.slane %v337, 1
    %v349 = vrot.slane %v200, 1
    %v350 = vsel %vm344, %v348, %v349
    %v351 = vrot.slane %v338, 1
    %v352 = vrot.slane %v201, 1
    %v353 = vsel %vm344, %v351, %v352
    %v354 = vrot.slane %v339, 1
    %v355 = vrot.slane %v202, 1
    %v356 = vsel %vm344, %v354, %v355
    %v357 = vrot.slane %v340, 1
    %v358 = vrot.slane %v203, 1
    %v359 = vsel %vm344, %v357, %v358
    %v360 = vrot.slane %v341, 1
    %v361 = vrot.slane %v204, 1
    %v362 = vsel %vm344, %v360, %v361
    %v363 = vrot.slane %v342, 1
    %v364 = vrot.slane %v205, 1
    %v365 = vsel %vm344, %v363, %v364
    %v366 = vrot.slane %v343, 1
    %v367 = vrot.slane %v206, 1
    %v368 = vsel %vm344, %v366, %v367
    %369 = vrot.lane.b32.xlu0 %v347, 64
    %v370 = vpop.permute.xlu0 %369
    %371 = vrot.lane.b32.xlu0 %v350, 64
    %v372 = vpop.permute.xlu0 %371
    %373 = vrot.lane.b32.xlu0 %v353, 64
    %v374 = vpop.permute.xlu0 %373
    %375 = vrot.lane.b32.xlu0 %v356, 64
    %v376 = vpop.permute.xlu0 %375
    %377 = vrot.lane.b32.xlu0 %v359, 64
    %v378 = vpop.permute.xlu0 %377
    %379 = vrot.lane.b32.xlu0 %v362, 64
    %v380 = vpop.permute.xlu0 %379
    %381 = vrot.lane.b32.xlu0 %v365, 64
    %v382 = vpop.permute.xlu0 %381
    %383 = vrot.lane.b32.xlu0 %v368, 64
    %v384 = vpop.permute.xlu0 %383
    %v393 = vunpack.c.l.b16 %v135
    %v394 = vunpack.c.l.b16 %v136
    %v395 = vunpack.c.l.b16 %v137
    %v396 = vunpack.c.l.b16 %v138
    %v397 = vunpack.c.l.b16 %v139
    %v398 = vunpack.c.l.b16 %v140
    %v399 = vunpack.c.l.b16 %v141
    %v400 = vunpack.c.l.b16 %v142
    %v401 = vpack.c.b16 %v393, %v393
    %v402 = vpack.c.b16 %v394, %v394
    %v403 = vpack.c.b16 %v395, %v395
    %v404 = vpack.c.b16 %v396, %v396
    %v405 = vpack.c.b16 %v397, %v397
    %v406 = vpack.c.b16 %v398, %v398
    %v407 = vpack.c.b16 %v399, %v399
    %v408 = vpack.c.b16 %v400, %v400
    %vm409 = vsmask.f32 6400
    %v411 = vshrl.u32 %v336, 16
    %v413 = vrot.slane %v411, 1
    %v414 = vshll.u32 %v336, 16
    %v416 = vrot.slane %v414, 2
    %v417 = vor.u32 %v413, %v416
    %v419 = vshrl.u32 %v401, 16
    %v421 = vrot.slane %v419, 1
    %v422 = vshll.u32 %v401, 16
    %v424 = vrot.slane %v422, 2
    %v425 = vor.u32 %v421, %v424
    %v426 = vsel %vm409, %v417, %v425
    %v428 = vshrl.u32 %v337, 16
    %v430 = vrot.slane %v428, 1
    %v431 = vshll.u32 %v337, 16
    %v433 = vrot.slane %v431, 2
    %v434 = vor.u32 %v430, %v433
    %v436 = vshrl.u32 %v402, 16
    %v438 = vrot.slane %v436, 1
    %v439 = vshll.u32 %v402, 16
    %v441 = vrot.slane %v439, 2
    %v442 = vor.u32 %v438, %v441
    %v443 = vsel %vm409, %v434, %v442
    %v445 = vshrl.u32 %v338, 16
    %v447 = vrot.slane %v445, 1
    %v448 = vshll.u32 %v338, 16
    %v450 = vrot.slane %v448, 2
    %v451 = vor.u32 %v447, %v450
    %v453 = vshrl.u32 %v403, 16
    %v455 = vrot.slane %v453, 1
    %v456 = vshll.u32 %v403, 16
    %v458 = vrot.slane %v456, 2
    %v459 = vor.u32 %v455, %v458
    %v460 = vsel %vm409, %v451, %v459
    %v462 = vshrl.u32 %v339, 16
    %v464 = vrot.slane %v462, 1
    %v465 = vshll.u32 %v339, 16
    %v467 = vrot.slane %v465, 2
    %v468 = vor.u32 %v464, %v467
    %v470 = vshrl.u32 %v404, 16
    %v472 = vrot.slane %v470, 1
    %v473 = vshll.u32 %v404, 16
    %v475 = vrot.slane %v473, 2
    %v476 = vor.u32 %v472, %v475
    %v477 = vsel %vm409, %v468, %v476
    %v479 = vshrl.u32 %v340, 16
    %v481 = vrot.slane %v479, 1
    %v482 = vshll.u32 %v340, 16
    %v484 = vrot.slane %v482, 2
    %v485 = vor.u32 %v481, %v484
    %v487 = vshrl.u32 %v405, 16
    %v489 = vrot.slane %v487, 1
    %v490 = vshll.u32 %v405, 16
    %v492 = vrot.slane %v490, 2
    %v493 = vor.u32 %v489, %v492
    %v494 = vsel %vm409, %v485, %v493
    %v496 = vshrl.u32 %v341, 16
    %v498 = vrot.slane %v496, 1
    %v499 = vshll.u32 %v341, 16
    %v501 = vrot.slane %v499, 2
    %v502 = vor.u32 %v498, %v501
    %v504 = vshrl.u32 %v406, 16
    %v506 = vrot.slane %v504, 1
    %v507 = vshll.u32 %v406, 16
    %v509 = vrot.slane %v507, 2
    %v510 = vor.u32 %v506, %v509
    %v511 = vsel %vm409, %v502, %v510
    %v513 = vshrl.u32 %v342, 16
    %v515 = vrot.slane %v513, 1
    %v516 = vshll.u32 %v342, 16
    %v518 = vrot.slane %v516, 2
    %v519 = vor.u32 %v515, %v518
    %v521 = vshrl.u32 %v407, 16
    %v523 = vrot.slane %v521, 1
    %v524 = vshll.u32 %v407, 16
    %v526 = vrot.slane %v524, 2
    %v527 = vor.u32 %v523, %v526
    %v528 = vsel %vm409, %v519, %v527
    %v530 = vshrl.u32 %v343, 16
    %v532 = vrot.slane %v530, 1
    %v533 = vshll.u32 %v343, 16
    %v535 = vrot.slane %v533, 2
    %v536 = vor.u32 %v532, %v535
    %v538 = vshrl.u32 %v408, 16
    %v540 = vrot.slane %v538, 1
    %v541 = vshll.u32 %v408, 16
    %v543 = vrot.slane %v541, 2
    %v544 = vor.u32 %v540, %v543
    %v545 = vsel %vm409, %v536, %v544
    %546 = vrot.lane.b32.xlu0 %v426, 96
    %v547 = vpop.permute.xlu0 %546
    %548 = vrot.lane.b32.xlu0 %v443, 96
    %v549 = vpop.permute.xlu0 %548
    %550 = vrot.lane.b32.xlu0 %v460, 96
    %v551 = vpop.permute.xlu0 %550
    %552 = vrot.lane.b32.xlu0 %v477, 96
    %v553 = vpop.permute.xlu0 %552
    %554 = vrot.lane.b32.xlu0 %v494, 96
    %v555 = vpop.permute.xlu0 %554
    %556 = vrot.lane.b32.xlu0 %v511, 96
    %v557 = vpop.permute.xlu0 %556
    %558 = vrot.lane.b32.xlu0 %v528, 96
    %v559 = vpop.permute.xlu0 %558
    %560 = vrot.lane.b32.xlu0 %v545, 96
    %v561 = vpop.permute.xlu0 %560
    %vm562 = vcmask 261120
    %v564 = vsel %vm562, %v175, %v305
    %v566 = vsel %vm562, %v176, %v307
    %v568 = vsel %vm562, %v177, %v309
    %v570 = vsel %vm562, %v178, %v311
    %v572 = vsel %vm562, %v179, %v313
    %v574 = vsel %vm562, %v180, %v315
    %v576 = vsel %vm562, %v181, %v317
    %v578 = vsel %vm562, %v182, %v319
    %vm579 = vcmask 523264
    %v581 = vsel %vm579, %v564, %v370
    %v583 = vsel %vm579, %v566, %v372
    %v585 = vsel %vm579, %v568, %v374
    %v587 = vsel %vm579, %v570, %v376
    %v589 = vsel %vm579, %v572, %v378
    %v591 = vsel %vm579, %v574, %v380
    %v593 = vsel %vm579, %v576, %v382
    %v595 = vsel %vm579, %v578, %v384
    %vm596 = vcmask 785408
    %v598 = vsel %vm596, %v581, %v547
    %v601 = vsel %vm596, %v583, %v549
    %v604 = vsel %vm596, %v585, %v551
    %v607 = vsel %vm596, %v587, %v553
    %v610 = vsel %vm596, %v589, %v555
    %v613 = vsel %vm596, %v591, %v557
    %v616 = vsel %vm596, %v593, %v559
    %v619 = vsel %vm596, %v595, %v561
    %v621 = vld [vmem:[#allocation5] sm:$0xf]
    %v622 = vld [vmem:[#allocation5 + $0x4] sm:$0xf]
    %v623 = vld [vmem:[#allocation5 + $0x8] sm:$0xf]
    %v624 = vld [vmem:[#allocation5 + $0xc] sm:$0xf]
    %v625 = vld [vmem:[#allocation5 + $0x10] sm:$0xf]
    %v626 = vld [vmem:[#allocation5 + $0x14] sm:$0xf]
    %v627 = vld [vmem:[#allocation5 + $0x18] sm:$0xf]
    %v628 = vld [vmem:[#allocation5 + $0x1c] sm:$0xf]
    %v629 = vld [vmem:[#allocation5 + $0x20] sm:$0xf]
    %v630 = vld [vmem:[#allocation5 + $0x24] sm:$0xf]
    %v631 = vld [vmem:[#allocation5 + $0x28] sm:$0xf]
    %v632 = vld [vmem:[#allocation5 + $0x2c] sm:$0xf]
    %v633 = vld [vmem:[#allocation5 + $0x30] sm:$0xf]
    %v634 = vld [vmem:[#allocation5 + $0x34] sm:$0xf]
    %v635 = vld [vmem:[#allocation5 + $0x38] sm:$0xf]
    %v636 = vld [vmem:[#allocation5 + $0x3c] sm:$0xf]
    %v653 = vunpack.c.l.b16 %v621
    %v654 = vunpack.c.l.b16 %v622
    %v655 = vunpack.c.l.b16 %v623
    %v656 = vunpack.c.l.b16 %v624
    %v657 = vunpack.c.l.b16 %v625
    %v658 = vunpack.c.l.b16 %v626
    %v659 = vunpack.c.l.b16 %v627
    %v660 = vunpack.c.l.b16 %v628
    %v661 = vunpack.c.l.b16 %v629
    %v662 = vunpack.c.l.b16 %v630
    %v663 = vunpack.c.l.b16 %v631
    %v664 = vunpack.c.l.b16 %v632
    %v665 = vunpack.c.l.b16 %v633
    %v666 = vunpack.c.l.b16 %v634
    %v667 = vunpack.c.l.b16 %v635
    %v668 = vunpack.c.l.b16 %v636
    %v669 = vpack.c.b16 %v654, %v653
    %v670 = vpack.c.b16 %v656, %v655
    %v671 = vpack.c.b16 %v658, %v657
    %v672 = vpack.c.b16 %v660, %v659
    %v673 = vpack.c.b16 %v662, %v661
    %v674 = vpack.c.b16 %v664, %v663
    %v675 = vpack.c.b16 %v666, %v665
    %v676 = vpack.c.b16 %v668, %v667
    %685 = vmatprep.subr.bf16.mxu0 0
    %686 = vmatpush1.bf16.msra.mxu0 %v669
    %687 = vmatprep.subr.bf16.mxu0 0
    %688 = vmatpush1.bf16.msra.mxu0 %v670
    %689 = vmatprep.subr.bf16.mxu0 0
    %690 = vmatpush1.bf16.msra.mxu0 %v671
    %691 = vmatprep.subr.bf16.mxu0 0
    %692 = vmatpush1.bf16.msra.mxu0 %v672
    %693 = vmatprep.subr.bf16.mxu0 0
    %694 = vmatpush1.bf16.msra.mxu0 %v673
    %695 = vmatprep.subr.bf16.mxu0 0
    %696 = vmatpush1.bf16.msra.mxu0 %v674
    %697 = vmatprep.subr.bf16.mxu0 0
    %698 = vmatpush1.bf16.msra.mxu0 %v675
    %699 = vmatprep.subr.bf16.mxu0 0
    %700 = vmatpush1.bf16.msra.mxu0 %v676
    %701 = vmatprep.subr.bf16.mxu0 0
    %702 = vmatpush1.bf16.msra.mxu0 0
    %703 = vmatprep.subr.bf16.mxu0 0
    %704 = vmatpush1.bf16.msra.mxu0 0
    %705 = vmatprep.subr.bf16.mxu0 0
    %706 = vmatpush1.bf16.msra.mxu0 0
    %707 = vmatprep.subr.bf16.mxu0 0
    %708 = vmatpush1.bf16.msra.mxu0 0
    %709 = vmatprep.subr.bf16.mxu0 0
    %710 = vmatpush1.bf16.msra.mxu0 0
    %711 = vmatprep.subr.bf16.mxu0 0
    %712 = vmatpush1.bf16.msra.mxu0 0
    %713 = vmatprep.subr.bf16.mxu0 0
    %714 = vmatpush1.bf16.msra.mxu0 0
    %715 = vmatprep.subr.bf16.mxu0 0
    %716 = vmatpush1.bf16.msra.mxu0 0
    %717 = vmatprep.mubr.bf16.mxu0 0
    %718 = vmatmul.mubr.bf16.gmra.mrb[0].mxu0 %v598
    %v719 = vpop.f32.mrb[0].mxu0
    %v720 = vadd.f32 0.0, %v719
    %v721 = vpop.f32.mrb[0].mxu0
    %v722 = vpop.f32.mrb[0].mxu0
    %v723 = vadd.f32 0.0, %v722
    %v724 = vpop.f32.mrb[0].mxu0
    %725 = vmatprep.mubr.bf16.mxu0 0
    %726 = vmatmul.mubr.bf16.gmra.mrb[0].mxu0 %v601
    %v727 = vpop.f32.mrb[0].mxu0
    %v728 = vadd.f32 0.0, %v727
    %v729 = vpop.f32.mrb[0].mxu0
    %v730 = vpop.f32.mrb[0].mxu0
    %v731 = vadd.f32 0.0, %v730
    %v732 = vpop.f32.mrb[0].mxu0
    %733 = vmatprep.mubr.bf16.mxu0 0
    %734 = vmatmul.mubr.bf16.gmra.mrb[0].mxu0 %v604
    %v735 = vpop.f32.mrb[0].mxu0
    %v736 = vadd.f32 0.0, %v735
    %v737 = vpop.f32.mrb[0].mxu0
    %v738 = vpop.f32.mrb[0].mxu0
    %v739 = vadd.f32 0.0, %v738
    %v740 = vpop.f32.mrb[0].mxu0
    %741 = vmatprep.mubr.bf16.mxu0 0
    %742 = vmatmul.mubr.bf16.gmra.mrb[0].mxu0 %v607
    %v743 = vpop.f32.mrb[0].mxu0
    %v744 = vadd.f32 0.0, %v743
    %v745 = vpop.f32.mrb[0].mxu0
    %v746 = vpop.f32.mrb[0].mxu0
    %v747 = vadd.f32 0.0, %v746
    %v748 = vpop.f32.mrb[0].mxu0
    %749 = vmatprep.mubr.bf16.mxu0 0
    %750 = vmatmul.mubr.bf16.gmra.mrb[0].mxu0 %v610
    %v751 = vpop.f32.mrb[0].mxu0
    %v752 = vadd.f32 0.0, %v751
    %v753 = vpop.f32.mrb[0].mxu0
    %v754 = vpop.f32.mrb[0].mxu0
    %v755 = vadd.f32 0.0, %v754
    %v756 = vpop.f32.mrb[0].mxu0
    %757 = vmatprep.mubr.bf16.mxu0 0
    %758 = vmatmul.mubr.bf16.gmra.mrb[0].mxu0 %v613
    %v759 = vpop.f32.mrb[0].mxu0
    %v760 = vadd.f32 0.0, %v759
    %v761 = vpop.f32.mrb[0].mxu0
    %v762 = vpop.f32.mrb[0].mxu0
    %v763 = vadd.f32 0.0, %v762
    %v764 = vpop.f32.mrb[0].mxu0
    %765 = vmatprep.mubr.bf16.mxu0 0
    %766 = vmatmul.mubr.bf16.gmra.mrb[0].mxu0 %v616
    %v767 = vpop.f32.mrb[0].mxu0
    %v768 = vadd.f32 0.0, %v767
    %v769 = vpop.f32.mrb[0].mxu0
    %v770 = vpop.f32.mrb[0].mxu0
    %v771 = vadd.f32 0.0, %v770
    %v772 = vpop.f32.mrb[0].mxu0
    %773 = vmatprep.mubr.bf16.mxu0 0
    %774 = vmatmul.mubr.bf16.gmra.mrb[0].mxu0 %v619
    %v775 = vpop.f32.mrb[0].mxu0
    %v776 = vadd.f32 0.0, %v775
    %v777 = vpop.f32.mrb[0].mxu0
    %v778 = vpop.f32.mrb[0].mxu0
    %v779 = vadd.f32 0.0, %v778
    %v780 = vpop.f32.mrb[0].mxu0
    %781 = vdwg.mxu0
    %v782 = vld [vmem:[#allocation8] sm:$0x7]
    %v783 = vlaneseq
    %v784 = vshrl.u32 %v783, 7
    %v785 = vsub.s32 0, %v784
    %v786 = vrot.slane %v782, %v785
    %v787 = vadd.f32 %v720, %v786
    %v788 = vadd.f32 %v723, %v786
    %v789 = vadd.f32 %v728, %v786
    %v790 = vadd.f32 %v731, %v786
    %v791 = vadd.f32 %v736, %v786
    %v792 = vadd.f32 %v739, %v786
    %v793 = vadd.f32 %v744, %v786
    %v794 = vadd.f32 %v747, %v786
    %v795 = vadd.f32 %v752, %v786
    %v796 = vadd.f32 %v755, %v786
    %v797 = vadd.f32 %v760, %v786
    %v798 = vadd.f32 %v763, %v786
    %v799 = vadd.f32 %v768, %v786
    %v800 = vadd.f32 %v771, %v786
    %v801 = vadd.f32 %v776, %v786
    %v802 = vadd.f32 %v779, %v786
    %v803 = vmax.f32 %v787, 0.0
    %v804 = vmax.f32 %v788, 0.0
    %v805 = vmax.f32 %v789, 0.0
    %v806 = vmax.f32 %v790, 0.0
    %v807 = vmax.f32 %v791, 0.0
    %v808 = vmax.f32 %v792, 0.0
    %v809 = vmax.f32 %v793, 0.0
    %v810 = vmax.f32 %v794, 0.0
    %v811 = vmax.f32 %v795, 0.0
    %v812 = vmax.f32 %v796, 0.0
    %v813 = vmax.f32 %v797, 0.0
    %v814 = vmax.f32 %v798, 0.0
    %v815 = vmax.f32 %v799, 0.0
    %v816 = vmax.f32 %v800, 0.0
    %v817 = vmax.f32 %v801, 0.0
    %v818 = vmax.f32 %v802, 0.0
    %v819 = vld [vmem:[#allocation7] sm:$0xff]
    %v820 = vld [vmem:[#allocation7 + $0x8] sm:$0xff]
    %v821 = vmul.f32 %v803, %v819
    %v822 = vmul.f32 %v804, %v820
    %v823 = vmul.f32 %v805, %v819
    %v824 = vmul.f32 %v806, %v820
    %v825 = vmul.f32 %v807, %v819
    %v826 = vmul.f32 %v808, %v820
    %v827 = vmul.f32 %v809, %v819
    %v828 = vmul.f32 %v810, %v820
    %v829 = vmul.f32 %v811, %v819
    %v830 = vmul.f32 %v812, %v820
    %v831 = vmul.f32 %v813, %v819
    %v832 = vmul.f32 %v814, %v820
    %v833 = vmul.f32 %v815, %v819
    %v834 = vmul.f32 %v816, %v820
    %v835 = vmul.f32 %v817, %v819
    %v836 = vmul.f32 %v818, %v820
    %v837 = vadd.f32 %v821, %v822
    %v838 = vrot.slane %v837, 4
    %v839 = vadd.f32 %v837, %v838
    %v840 = vrot.slane %v839, 2
    %v841 = vadd.f32 %v839, %v840
    %v842 = vrot.slane %v841, 1
    %v843 = vadd.f32 %v841, %v842
    %v844 = vadd.f32 %v823, %v824
    %v845 = vrot.slane %v844, 4
    %v846 = vadd.f32 %v844, %v845
    %v847 = vrot.slane %v846, 2
    %v848 = vadd.f32 %v846, %v847
    %v849 = vrot.slane %v848, 1
    %v850 = vadd.f32 %v848, %v849
    %v851 = vadd.f32 %v825, %v826
    %v852 = vrot.slane %v851, 4
    %v853 = vadd.f32 %v851, %v852
    %v854 = vrot.slane %v853, 2
    %v855 = vadd.f32 %v853, %v854
    %v856 = vrot.slane %v855, 1
    %v857 = vadd.f32 %v855, %v856
    %v858 = vadd.f32 %v827, %v828
    %v859 = vrot.slane %v858, 4
    %v860 = vadd.f32 %v858, %v859
    %v861 = vrot.slane %v860, 2
    %v862 = vadd.f32 %v860, %v861
    %v863 = vrot.slane %v862, 1
    %v864 = vadd.f32 %v862, %v863
    %v865 = vadd.f32 %v829, %v830
    %v866 = vrot.slane %v865, 4
    %v867 = vadd.f32 %v865, %v866
    %v868 = vrot.slane %v867, 2
    %v869 = vadd.f32 %v867, %v868
    %v870 = vrot.slane %v869, 1
    %v871 = vadd.f32 %v869, %v870
    %v872 = vadd.f32 %v831, %v832
    %v873 = vrot.slane %v872, 4
    %v874 = vadd.f32 %v872, %v873
    %v875 = vrot.slane %v874, 2
    %v876 = vadd.f32 %v874, %v875
    %v877 = vrot.slane %v876, 1
    %v878 = vadd.f32 %v876, %v877
    %v879 = vadd.f32 %v833, %v834
    %v880 = vrot.slane %v879, 4
    %v881 = vadd.f32 %v879, %v880
    %v882 = vrot.slane %v881, 2
    %v883 = vadd.f32 %v881, %v882
    %v884 = vrot.slane %v883, 1
    %v885 = vadd.f32 %v883, %v884
    %v886 = vadd.f32 %v835, %v836
    %v887 = vrot.slane %v886, 4
    %v888 = vadd.f32 %v886, %v887
    %v889 = vrot.slane %v888, 2
    %v890 = vadd.f32 %v888, %v889
    %v891 = vrot.slane %v890, 1
    %v892 = vadd.f32 %v890, %v891
    %v893 = vmax.f32 %v821, %v822
    %v894 = vrot.slane %v893, 4
    %v895 = vmax.f32 %v893, %v894
    %v896 = vrot.slane %v895, 2
    %v897 = vmax.f32 %v895, %v896
    %v898 = vrot.slane %v897, 1
    %v899 = vmax.f32 %v897, %v898
    %v900 = vmax.f32 %v823, %v824
    %v901 = vrot.slane %v900, 4
    %v902 = vmax.f32 %v900, %v901
    %v903 = vrot.slane %v902, 2
    %v904 = vmax.f32 %v902, %v903
    %v905 = vrot.slane %v904, 1
    %v906 = vmax.f32 %v904, %v905
    %v907 = vmax.f32 %v825, %v826
    %v908 = vrot.slane %v907, 4
    %v909 = vmax.f32 %v907, %v908
    %v910 = vrot.slane %v909, 2
    %v911 = vmax.f32 %v909, %v910
    %v912 = vrot.slane %v911, 1
    %v913 = vmax.f32 %v911, %v912
    %v914 = vmax.f32 %v827, %v828
    %v915 = vrot.slane %v914, 4
    %v916 = vmax.f32 %v914, %v915
    %v917 = vrot.slane %v916, 2
    %v918 = vmax.f32 %v916, %v917
    %v919 = vrot.slane %v918, 1
    %v920 = vmax.f32 %v918, %v919
    %v921 = vmax.f32 %v829, %v830
    %v922 = vrot.slane %v921, 4
    %v923 = vmax.f32 %v921, %v922
    %v924 = vrot.slane %v923, 2
    %v925 = vmax.f32 %v923, %v924
    %v926 = vrot.slane %v925, 1
    %v927 = vmax.f32 %v925, %v926
    %v928 = vmax.f32 %v831, %v832
    %v929 = vrot.slane %v928, 4
    %v930 = vmax.f32 %v928, %v929
    %v931 = vrot.slane %v930, 2
    %v932 = vmax.f32 %v930, %v931
    %v933 = vrot.slane %v932, 1
    %v934 = vmax.f32 %v932, %v933
    %v935 = vmax.f32 %v833, %v834
    %v936 = vrot.slane %v935, 4
    %v937 = vmax.f32 %v935, %v936
    %v938 = vrot.slane %v937, 2
    %v939 = vmax.f32 %v937, %v938
    %v940 = vrot.slane %v939, 1
    %v941 = vmax.f32 %v939, %v940
    %v942 = vmax.f32 %v835, %v836
    %v943 = vrot.slane %v942, 4
    %v944 = vmax.f32 %v942, %v943
    %v945 = vrot.slane %v944, 2
    %v946 = vmax.f32 %v944, %v945
    %v947 = vrot.slane %v946, 1
    %v948 = vmax.f32 %v946, %v947
    %v949 = vlaneseq
    %v950 = vshrl.u32 %v949, 7
    %v951 = vsub.s32 1, %v950
    %v952 = vrot.slane %v782, %v951
    %v953 = vmul.f32 %v843, %v952
    %v954 = vmul.f32 %v850, %v952
    %v955 = vmul.f32 %v857, %v952
    %v956 = vmul.f32 %v864, %v952
    %v957 = vmul.f32 %v871, %v952
    %v958 = vmul.f32 %v878, %v952
    %v959 = vmul.f32 %v885, %v952
    %v960 = vmul.f32 %v892, %v952
    %v961 = vlaneseq
    %v962 = vshrl.u32 %v961, 7
    %v963 = vsub.s32 2, %v962
    %v964 = vrot.slane %v782, %v963
    %v973 = vrot.slane %v954, 7
    %vm974 = vcmask 1041409
    %v975 = vsel %vm974, %v973, %v953
    %v976 = vrot.slane %v955, 6
    %vm977 = vcmask 1042434
    %v978 = vsel %vm977, %v976, %v975
    %v979 = vrot.slane %v956, 5
    %vm980 = vcmask 1043459
    %v981 = vsel %vm980, %v979, %v978
    %v982 = vrot.slane %v957, 4
    %vm983 = vcmask 1044484
    %v984 = vsel %vm983, %v982, %v981
    %v985 = vrot.slane %v958, 3
    %vm986 = vcmask 1045509
    %v987 = vsel %vm986, %v985, %v984
    %v988 = vrot.slane %v959, 2
    %vm989 = vcmask 1046534
    %v990 = vsel %vm989, %v988, %v987
    %v991 = vrot.slane %v960, 1
    %vm992 = vcmask 1047559
    %v993 = vsel %vm992, %v991, %v990
    %v995 = vmul.f32 %v964, %v993
    %v996 = vsub.f32 1.0, %v782
    %v997 = vlaneseq
    %v998 = vshrl.u32 %v997, 7
    %v999 = vsub.s32 2, %v998
    %v1000 = vrot.slane %v996, %v999
    %v1009 = vsel %vm974, %v906, %v899
    %v1010 = vsel %vm977, %v913, %v1009
    %v1011 = vsel %vm980, %v920, %v1010
    %v1012 = vsel %vm983, %v927, %v1011
    %v1013 = vsel %vm986, %v934, %v1012
    %v1014 = vsel %vm989, %v941, %v1013
    %v1015 = vsel %vm992, %v948, %v1014
    %v1017 = vmul.f32 %v1000, %v1015
    %v1018 = vadd.f32 %v995, %v1017
    %v1019 = vld [vmem:[#allocation10] sm:$0xff]
    %v1020 = vld [vmem:[#allocation10 + $0x8] sm:$0xff]
    %v1021 = vld [vmem:[#allocation10 + $0x10] sm:$0xff]
    %v1022 = vld [vmem:[#allocation10 + $0x18] sm:$0xff]
    %v1023 = vld [vmem:[#allocation10 + $0x20] sm:$0xff]
    %v1024 = vld [vmem:[#allocation10 + $0x28] sm:$0xff]
    %v1025 = vld [vmem:[#allocation10 + $0x30] sm:$0xff]
    %v1026 = vld [vmem:[#allocation10 + $0x38] sm:$0xff]
    %v1027 = vld [vmem:[#allocation10 + $0x40] sm:$0xff]
    %v1028 = vld [vmem:[#allocation10 + $0x48] sm:$0xff]
    %v1029 = vld [vmem:[#allocation10 + $0x50] sm:$0xff]
    %v1030 = vld [vmem:[#allocation10 + $0x58] sm:$0xff]
    %v1031 = vld [vmem:[#allocation10 + $0x60] sm:$0xff]
    %v1032 = vld [vmem:[#allocation10 + $0x68] sm:$0xff]
    %v1033 = vld [vmem:[#allocation10 + $0x70] sm:$0xff]
    %v1034 = vld [vmem:[#allocation10 + $0x78] sm:$0xff]
    %v1035 = vld [vmem:[#allocation11] sm:$0x1]
    %v1037 = vlaneseq
    %v1038 = vshrl.u32 %v1037, 7
    %v1039 = vsub.s32 0, %v1038
    %v1040 = vrot.slane %v1035, %v1039
    %1042 = vmatprep.subr.mxu0 0.0
    %1043 = vmatpush1.msra.mxu0 %v1019
    %1044 = vmatprep.subr.mxu0 0.0
    %1045 = vmatpush1.msra.mxu0 %v1020
    %1046 = vmatprep.subr.mxu0 0.0
    %1047 = vmatpush1.msra.mxu0 %v1021
    %1048 = vmatprep.subr.mxu0 0.0
    %1049 = vmatpush1.msra.mxu0 %v1022
    %1050 = vmatprep.subr.mxu0 0.0
    %1051 = vmatpush1.msra.mxu0 %v1023
    %1052 = vmatprep.subr.mxu0 0.0
    %1053 = vmatpush1.msra.mxu0 %v1024
    %1054 = vmatprep.subr.mxu0 0.0
    %1055 = vmatpush1.msra.mxu0 %v1025
    %1056 = vmatprep.subr.mxu0 0.0
    %1057 = vmatpush1.msra.mxu0 %v1026
    %1058 = vmatprep.subr.mxu0 0.0
    %1059 = vmatpush1.msra.mxu0 %v1027
    %1060 = vmatprep.subr.mxu0 0.0
    %1061 = vmatpush1.msra.mxu0 %v1028
    %1062 = vmatprep.subr.mxu0 0.0
    %1063 = vmatpush1.msra.mxu0 %v1029
    %1064 = vmatprep.subr.mxu0 0.0
    %1065 = vmatpush1.msra.mxu0 %v1030
    %1066 = vmatprep.subr.mxu0 0.0
    %1067 = vmatpush1.msra.mxu0 %v1031
    %1068 = vmatprep.subr.mxu0 0.0
    %1069 = vmatpush1.msra.mxu0 %v1032
    %1070 = vmatprep.subr.mxu0 0.0
    %1071 = vmatpush1.msra.mxu0 %v1033
    %1072 = vmatprep.subr.mxu0 0.0
    %1073 = vmatpush1.msra.mxu0 %v1034
    %1074 = vmatprep.subr.mxu0 0.0
    %1075 = vmatpush1.msra.mxu0 0.0
    %1076 = vmatprep.subr.mxu0 0.0
    %1077 = vmatpush1.msra.mxu0 0.0
    %1078 = vmatprep.subr.mxu0 0.0
    %1079 = vmatpush1.msra.mxu0 0.0
    %1080 = vmatprep.subr.mxu0 0.0
    %1081 = vmatpush1.msra.mxu0 0.0
    %1082 = vmatprep.subr.mxu0 0.0
    %1083 = vmatpush1.msra.mxu0 0.0
    %1084 = vmatprep.subr.mxu0 0.0
    %1085 = vmatpush1.msra.mxu0 0.0
    %1086 = vmatprep.subr.mxu0 0.0
    %1087 = vmatpush1.msra.mxu0 0.0
    %1088 = vmatprep.subr.mxu0 0.0
    %1089 = vmatpush1.msra.mxu0 0.0
    %1090 = vmatprep.subr.mxu0 0.0
    %1091 = vmatpush1.msra.mxu0 0.0
    %1092 = vmatprep.subr.mxu0 0.0
    %1093 = vmatpush1.msra.mxu0 0.0
    %1094 = vmatprep.subr.mxu0 0.0
    %1095 = vmatpush1.msra.mxu0 0.0
    %1096 = vmatprep.subr.mxu0 0.0
    %1097 = vmatpush1.msra.mxu0 0.0
    %1098 = vmatprep.subr.mxu0 0.0
    %1099 = vmatpush1.msra.mxu0 0.0
    %1100 = vmatprep.subr.mxu0 0.0
    %1101 = vmatpush1.msra.mxu0 0.0
    %1102 = vmatprep.subr.mxu0 0.0
    %1103 = vmatpush1.msra.mxu0 0.0
    %1104 = vmatprep.subr.mxu0 0.0
    %1105 = vmatpush1.msra.mxu0 0.0
    %1106 = vmatprep.mubr.f32.mxu0 0.0
    %1107 = vmatmul.mubr.f32.gmra.mrb[0].mxu0 %v1018
    %v1108 = vpop.f32.mrb[0].mxu0
    %v1109 = vadd.f32 %v1040, %v1108
    %v1110 = vpop.f32.mrb[0].mxu0
    %1111 = vdwg.mxu0
    %1112 = vst [vmem:[#allocation13] sm:$0xff] %v1109
    // Predicated region
    $region50: #{dual_path_cnn_forward.1} parent=1 // pred_check
      _
    $region51: #{dual_path_cnn_forward.1} parent=1 // pred_check_branch
      %1114 = sbr.rel (0) target = $region53
    $region52: #{dual_path_cnn_forward.1} parent=1 // pred_region
      %s1116 = ssub.s32 128, 128
      %1117 = vsyncadd [#allocation4], %s1116
      %s1119 = sshll.u32 [#allocation13], 4
      %s1120 = int_to_ptr.vmem [resolvable:$true] %s1119
      %1122 = dma.vmem_to_hbm [thread:$0]  %s1120, 128, %s6, [#allocation4]
    $region53: #{dual_path_cnn_forward.1} parent=1 // pred_fallthru
      _
    // Predicated region
    $region54: #{dual_path_cnn_forward.1} parent=1 // pred_check
      _
    $region55: #{dual_path_cnn_forward.1} parent=1 // pred_check_branch
      %1124 = sbr.rel (0) target = $region57
    $region56: #{dual_path_cnn_forward.1} parent=1 // pred_region
      %1125 = dma.done [#allocation4], 128
    $region57: #{dual_path_cnn_forward.1} parent=1 // pred_fallthru
      _
    %1126 = vsyncpa [#allocation3], 1
    %1127 = vsyncpa [#allocation6], 1
    %1128 = vsyncpa [#allocation9], 1
    %1129 = vsyncpa [#allocation12], 1
    %1130 = vsyncpa [#allocation4], 1

</llo_original>
